<compile_context>
chip_gen: v5e
topology: v5e:2x2
jax: 0.10.0
libtpu: 0.0.40
codegen_flags: <defaults>
</compile_context>

<pallas_src>
import jax
import jax.numpy as jnp
from jax.experimental import pallas as pl
from jax.experimental.pallas import tpu as pltpu


def _round_up(x, m):
    return (x + m - 1) // m * m


def _pad2d(a, rows, cols, dtype):
    """Cast to dtype and zero-pad a 2-D array up to (rows, cols)."""
    a = a.astype(dtype)
    pr, pc = rows - a.shape[0], cols - a.shape[1]
    if pr == 0 and pc == 0:
        return a
    return jnp.pad(a, ((0, pr), (0, pc)))


def _fused_kernel(x_ref, wb_ref, bb_ref, wh_ref, bh_ref, emb_ref, out_ref):
    # base: Linear (bf16 MXU matmul, f32 accumulate) + bias + ReLU in f32.
    emb = jnp.dot(x_ref[...], wb_ref[...], preferred_element_type=jnp.float32)
    emb = jnp.maximum(emb + bb_ref[...], 0.0)
    emb_ref[...] = emb.astype(emb_ref.dtype)
    # head: Linear (bf16 MXU matmul, f32 accumulate) + bias.
    out = jnp.dot(emb.astype(jnp.bfloat16), wh_ref[...],
                  preferred_element_type=jnp.float32)
    out_ref[...] = (out + bh_ref[...]).astype(out_ref.dtype)


def _logits_only_kernel(x_ref, wb_ref, bb_ref, wh_ref, bh_ref, out_ref):
    # Same math, no embedding writeback.
    emb = jnp.dot(x_ref[...], wb_ref[...], preferred_element_type=jnp.float32)
    emb = jnp.maximum(emb + bb_ref[...], 0.0)
    out = jnp.dot(emb.astype(jnp.bfloat16), wh_ref[...],
                  preferred_element_type=jnp.float32)
    out_ref[...] = (out + bh_ref[...]).astype(out_ref.dtype)


def model_wrapper_forward(x_nchw, w_base, b_base, w_head, b_head,
                          return_embedding=True):
    """Runs base(x) then head(embedding) inside a single Pallas kernel.

    x_nchw : [N, C, H, W] float32
    w_base : [C*H*W, HIDDEN], b_base: [1, HIDDEN]
    w_head : [HIDDEN, NUM_CLASSES], b_head: [1, NUM_CLASSES]
    """
    n, c, h, w = x_nchw.shape
    k = c * h * w
    hidden = w_base.shape[1]
    num_classes = w_head.shape[1]

    # Lane-dense / sublane-aligned padded sizes.
    k_p = _round_up(k, 128)
    hid_p = _round_up(hidden, 128)
    nc_p = _round_up(num_classes, 128)

    # Batch tiling: one tile if small (padded to >=8 rows); 128-row tiles
    # (pipelined + megacore-shardable) once the batch grows.
    if n <= 128:
        tile_n = _round_up(max(n, 8), 8)
        n_p = tile_n
    else:
        tile_n = 128
        n_p = _round_up(n, tile_n)
    grid_n = n_p // tile_n

    # Flatten row-major (same order as torch.flatten(x, 1)), zero-pad, and cast
    # the matmul operands to bf16 (MXU-native); biases stay f32.
    x_p = _pad2d(x_nchw.reshape(n, k), n_p, k_p, jnp.bfloat16)
    wb_p = _pad2d(w_base, k_p, hid_p, jnp.bfloat16)
    bb_p = _pad2d(b_base.reshape(1, hidden), 1, hid_p, jnp.float32)
    wh_p = _pad2d(w_head, hid_p, nc_p, jnp.bfloat16)
    bh_p = _pad2d(b_head.reshape(1, num_classes), 1, nc_p, jnp.float32)

    # Advisory cost so XLA overlaps surrounding ops with this custom call.
    flops = 2 * n_p * k_p * hid_p + 2 * n_p * hid_p * nc_p
    bytes_accessed = (x_p.size * 2 + wb_p.size * 2 + wh_p.size * 2
                      + bb_p.size * 4 + bh_p.size * 4
                      + n_p * nc_p * 4
                      + (n_p * hid_p * 4 if return_embedding else 0))
    cost = pl.CostEstimate(flops=flops, transcendentals=0,
                           bytes_accessed=bytes_accessed)

    # x / outputs tiled over batch rows; weights & biases resident across grid.
    in_specs = [
        pl.BlockSpec((tile_n, k_p), lambda i: (i, 0)),
        pl.BlockSpec((k_p, hid_p), lambda i: (0, 0)),
        pl.BlockSpec((1, hid_p), lambda i: (0, 0)),
        pl.BlockSpec((hid_p, nc_p), lambda i: (0, 0)),
        pl.BlockSpec((1, nc_p), lambda i: (0, 0)),
    ]
    cparams = pltpu.CompilerParams(
        dimension_semantics=("parallel",),
        vmem_limit_bytes=64 << 20,
    )

    if return_embedding:
        emb_p, out_p = pl.pallas_call(
            _fused_kernel,
            out_shape=(jax.ShapeDtypeStruct((n_p, hid_p), jnp.float32),
                       jax.ShapeDtypeStruct((n_p, nc_p), jnp.float32)),
            grid=(grid_n,),
            in_specs=in_specs,
            out_specs=(pl.BlockSpec((tile_n, hid_p), lambda i: (i, 0)),
                       pl.BlockSpec((tile_n, nc_p), lambda i: (i, 0))),
            compiler_params=cparams,
            cost_estimate=cost,
        )(x_p, wb_p, bb_p, wh_p, bh_p)
        return emb_p[:n, :hidden], out_p[:n, :num_classes]

    out_p = pl.pallas_call(
        _logits_only_kernel,
        out_shape=jax.ShapeDtypeStruct((n_p, nc_p), jnp.float32),
        grid=(grid_n,),
        in_specs=in_specs,
        out_specs=pl.BlockSpec((tile_n, nc_p), lambda i: (i, 0)),
        compiler_params=cparams,
        cost_estimate=cost,
    )(x_p, wb_p, bb_p, wh_p, bh_p)
    return out_p[:n, :num_classes]


if __name__ == "__main__":
    # Small shapes consistent with the classification wrapper.
    N, C, H, W = 2, 4, 16, 16
    K = C * H * W          # 1024
    HIDDEN = 128
    NUM_CLASSES = 10

    key = jax.random.PRNGKey(0)
    kx, kwb, kbb, kwh, kbh = jax.random.split(key, 5)

    x = jax.random.normal(kx, (N, C, H, W), dtype=jnp.float32)
    w_base = jax.random.normal(kwb, (K, HIDDEN), dtype=jnp.float32) * 0.02
    b_base = jax.random.normal(kbb, (1, HIDDEN), dtype=jnp.float32) * 0.02
    w_head = jax.random.normal(kwh, (HIDDEN, NUM_CLASSES), dtype=jnp.float32) * 0.02
    b_head = jax.random.normal(kbh, (1, NUM_CLASSES), dtype=jnp.float32) * 0.02

    emb, out = model_wrapper_forward(x, w_base, b_base, w_head, b_head,
                                     return_embedding=True)
    out_only = model_wrapper_forward(x, w_base, b_base, w_head, b_head,
                                     return_embedding=False)
    jax.block_until_ready((emb, out, out_only))

    # Sanity check against plain-JAX f32 reference (bf16 matmul operands ->
    # loosened tolerance).
    x_flat = x.reshape(N, K)
    emb_ref = jnp.maximum(x_flat @ w_base + b_base, 0.0)
    out_ref = emb_ref @ w_head + b_head
    assert emb.shape == (N, HIDDEN) and out.shape == (N, NUM_CLASSES)
    assert out_only.shape == (N, NUM_CLASSES)
    assert jnp.allclose(emb, emb_ref, atol=2e-2, rtol=2e-2)
    assert jnp.allclose(out, out_ref, atol=2e-2, rtol=2e-2)
    assert jnp.allclose(out_only, out, atol=1e-6, rtol=1e-6)

    print("KERNEL_OK")
</pallas_src>

<mosaic_0001>
module attributes {stable_mosaic.version = 11 : i64} {
  func.func @_fused_kernel(%arg0: i32, %arg1: memref<8x1024xbf16, #tpu.memory_space<vmem>>, %arg2: memref<1024x128xbf16, #tpu.memory_space<vmem>>, %arg3: memref<1x128xf32, #tpu.memory_space<vmem>>, %arg4: memref<128x128xbf16, #tpu.memory_space<vmem>>, %arg5: memref<1x128xf32, #tpu.memory_space<vmem>>, %arg6: memref<8x128xf32, #tpu.memory_space<vmem>>, %arg7: memref<8x128xf32, #tpu.memory_space<vmem>>) attributes {dimension_semantics = [#tpu.dimension_semantics<parallel>], iteration_bounds = array<i64: 1>, scalar_prefetch = 0 : i64, scratch_operands = 0 : i64, tpu.core_type = #tpu.core_type<tc>, window_params = [{transform_indices = @transform_0, window_bounds = array<i64: 8, 1024>}, {pipeline_mode = #tpu.pipeline_mode<synchronous>, transform_indices = @transform_1, window_bounds = array<i64: 1024, 128>}, {pipeline_mode = #tpu.pipeline_mode<synchronous>, transform_indices = @transform_2, window_bounds = array<i64: 1, 128>}, {pipeline_mode = #tpu.pipeline_mode<synchronous>, transform_indices = @transform_3, window_bounds = array<i64: 128, 128>}, {pipeline_mode = #tpu.pipeline_mode<synchronous>, transform_indices = @transform_4, window_bounds = array<i64: 1, 128>}, {transform_indices = @transform_5, window_bounds = array<i64: 8, 128>}, {transform_indices = @transform_6, window_bounds = array<i64: 8, 128>}]} {
    %c0 = arith.constant 0 : index
    %c0_0 = arith.constant 0 : index
    %0 = vector.load %arg1[%c0, %c0_0] : memref<8x1024xbf16, #tpu.memory_space<vmem>>, vector<8x1024xbf16>
    %c0_1 = arith.constant 0 : index
    %c0_2 = arith.constant 0 : index
    %1 = vector.load %arg2[%c0_1, %c0_2] : memref<1024x128xbf16, #tpu.memory_space<vmem>>, vector<1024x128xbf16>
    %cst = arith.constant dense<0.000000e+00> : vector<8x128xf32>
    %2 = tpu.matmul %0, %1, %cst {dimension_numbers = #tpu.dot_dimension_numbers<[1], [0], [0], [1], [0, 0, 1, 1], [], []>} : vector<8x1024xbf16>, vector<1024x128xbf16>, vector<8x128xf32> -> vector<8x128xf32>
    %c0_3 = arith.constant 0 : index
    %c0_4 = arith.constant 0 : index
    %3 = vector.load %arg3[%c0_3, %c0_4] : memref<1x128xf32, #tpu.memory_space<vmem>>, vector<1x128xf32>
    %4 = vector.broadcast %3 : vector<1x128xf32> to vector<8x128xf32>
    %5 = arith.addf %2, %4 : vector<8x128xf32>
    %cst_5 = arith.constant 0.000000e+00 : f32
    %6 = vector.broadcast %cst_5 : f32 to vector<8x128xf32>
    %7 = arith.maximumf %5, %6 : vector<8x128xf32>
    %c0_6 = arith.constant 0 : index
    %c0_7 = arith.constant 0 : index
    %8 = vector.load %arg6[%c0_6, %c0_7] : memref<8x128xf32, #tpu.memory_space<vmem>>, vector<8x128xf32>
    tpu.vector_store %arg6[%c0_6, %c0_7], %7 {strides = array<i32>} : memref<8x128xf32, #tpu.memory_space<vmem>>, vector<8x128xf32>,
    %9 = arith.truncf %7 : vector<8x128xf32> to vector<8x128xbf16>
    %c0_8 = arith.constant 0 : index
    %c0_9 = arith.constant 0 : index
    %10 = vector.load %arg4[%c0_8, %c0_9] : memref<128x128xbf16, #tpu.memory_space<vmem>>, vector<128x128xbf16>
    %cst_10 = arith.constant dense<0.000000e+00> : vector<8x128xf32>
    %11 = tpu.matmul %9, %10, %cst_10 {dimension_numbers = #tpu.dot_dimension_numbers<[1], [0], [0], [1], [0, 0, 1, 1], [], []>} : vector<8x128xbf16>, vector<128x128xbf16>, vector<8x128xf32> -> vector<8x128xf32>
    %c0_11 = arith.constant 0 : index
    %c0_12 = arith.constant 0 : index
    %12 = vector.load %arg5[%c0_11, %c0_12] : memref<1x128xf32, #tpu.memory_space<vmem>>, vector<1x128xf32>
    %13 = vector.broadcast %12 : vector<1x128xf32> to vector<8x128xf32>
    %14 = arith.addf %11, %13 : vector<8x128xf32>
    %c0_13 = arith.constant 0 : index
    %c0_14 = arith.constant 0 : index
    %15 = vector.load %arg7[%c0_13, %c0_14] : memref<8x128xf32, #tpu.memory_space<vmem>>, vector<8x128xf32>
    tpu.vector_store %arg7[%c0_13, %c0_14], %14 {strides = array<i32>} : memref<8x128xf32, #tpu.memory_space<vmem>>, vector<8x128xf32>,
    return
  }
  func.func @transform_0(%arg0: i32) -> (i32, i32) {
    %c0_i32 = arith.constant 0 : i32
    %c0_i32_0 = arith.constant 0 : i32
    return %arg0, %c0_i32 : i32, i32
  }
  func.func @transform_1(%arg0: i32) -> (i32, i32) {
    %c0_i32 = arith.constant 0 : i32
    %c0_i32_0 = arith.constant 0 : i32
    %c0_i32_1 = arith.constant 0 : i32
    return %c0_i32, %c0_i32_0 : i32, i32
  }
  func.func @transform_2(%arg0: i32) -> (i32, i32) {
    %c0_i32 = arith.constant 0 : i32
    %c0_i32_0 = arith.constant 0 : i32
    %c0_i32_1 = arith.constant 0 : i32
    return %c0_i32, %c0_i32_0 : i32, i32
  }
  func.func @transform_3(%arg0: i32) -> (i32, i32) {
    %c0_i32 = arith.constant 0 : i32
    %c0_i32_0 = arith.constant 0 : i32
    %c0_i32_1 = arith.constant 0 : i32
    return %c0_i32, %c0_i32_0 : i32, i32
  }
  func.func @transform_4(%arg0: i32) -> (i32, i32) {
    %c0_i32 = arith.constant 0 : i32
    %c0_i32_0 = arith.constant 0 : i32
    %c0_i32_1 = arith.constant 0 : i32
    return %c0_i32, %c0_i32_0 : i32, i32
  }
  func.func @transform_5(%arg0: i32) -> (i32, i32) {
    %c0_i32 = arith.constant 0 : i32
    %c0_i32_0 = arith.constant 0 : i32
    return %arg0, %c0_i32 : i32, i32
  }
  func.func @transform_6(%arg0: i32) -> (i32, i32) {
    %c0_i32 = arith.constant 0 : i32
    %c0_i32_0 = arith.constant 0 : i32
    return %arg0, %c0_i32 : i32, i32
  }
}

</mosaic_0001>

<llo_original>
// kernel: tpu_custom_call.1
$region0: #{tpu_custom_call.1}
  #allocation0 [shape = 'u32[]', space=smem, size = 0x4, offset = 0x4, fixed_abs, tag = 'smem constant byte address 0x4 - core index']
  #allocation1 [shape = 'u32[72,128]{1,0:T(1,128)}', space=vmem, size = 0x9000, scoped, tag = 'internal scratch']
  %s0 = inlined_call_operand.hbm [shape: bf16[8,1024], index: 0, kind: input, shape index: {}]
  %s1 = inlined_call_operand.hbm [shape: bf16[1024,128], index: 1, kind: input, shape index: {}]
  %s2 = inlined_call_operand.vmem [shape: f32[1,128], index: 2, kind: input, shape index: {}]
  %s3 = inlined_call_operand.hbm [shape: bf16[128,128], index: 3, kind: input, shape index: {}]
  %s4 = inlined_call_operand.vmem [shape: f32[1,128], index: 4, kind: input, shape index: {}]
  %s5 = inlined_call_operand.hbm [shape: f32[8,128], index: 5, kind: output, shape index: {0}]
  %s6 = inlined_call_operand.hbm [shape: f32[8,128], index: 6, kind: output, shape index: {1}]
  %7 = xla_tuple %s5, %s6
  %s8 = sld [smem:[#allocation0]]
  $region50: #{tpu_custom_call.1} parent=0
    _
  %s10 = ssub.s32 1, %s8
  %s11 = scalar_select 0, %s10, %s8
  $region1: #{tpu_custom_call.1} parent=0
    #allocation2 [shape = 'u8[16384]{0}', space=vmem, size = 0x4000, scoped, tag = 'input window, operand 0, single buffered']
    #allocation3 [shape = 's32[1]{0}', space=sflag, size = 0x4, scoped, tag = 'scoped memory for tpu_custom_call.1']
    #allocation4 [shape = 's32[1]{0}', space=sflag, size = 0x4, scoped, tag = 'scoped memory for tpu_custom_call.1']
    #allocation5 [shape = 'u8[262144]{0}', space=vmem, size = 0x40000, scoped, tag = 'input window, operand 1, single buffered']
    #allocation6 [shape = 's32[1]{0}', space=sflag, size = 0x4, scoped, tag = 'scoped memory for tpu_custom_call.1']
    #allocation7 [shape = 'u8[32768]{0}', space=vmem, size = 0x8000, scoped, tag = 'input window, operand 3, single buffered']
    #allocation8 [shape = 'u8[4096]{0}', space=vmem, size = 0x1000, scoped, tag = 'output window, operand 0, single buffered']
    #allocation9 [shape = 'u8[4096]{0}', space=vmem, size = 0x1000, scoped, tag = 'output window, operand 1, single buffered']
    #allocation10 [shape = 's32[1]{0}', space=sflag, size = 0x4, scoped, tag = 'scoped memory for tpu_custom_call.1']
    %12 = vsyncpa [#allocation3], 0
    %13 = vsyncpa [#allocation6], 0
    %14 = vsyncpa [#allocation4], 0
    %15 = vsyncpa [#allocation10], 0
    // Predicated region
    $region2: #{tpu_custom_call.1} parent=1 // pred_check
      _
    $region3: #{tpu_custom_call.1} parent=1 // pred_check_branch
      %17 = sbr.rel (0) target = $region5
    $region4: #{tpu_custom_call.1} parent=1 // pred_region
      %19 = vsyncadd [#allocation3], 0
      %s21 = sshll.u32 %s0, 4
      %s22 = int_to_ptr.hbm [resolvable:$true] %s21
      %s23 = sshll.u32 [#allocation2], 4
      %s24 = int_to_ptr.vmem [resolvable:$true] %s23
      %26 = dma.hbm_to_vmem [thread:$0]  %s22, 512, %s24, [#allocation3]
    $region5: #{tpu_custom_call.1} parent=1 // pred_fallthru
      _
    // Predicated region
    $region6: #{tpu_custom_call.1} parent=1 // pred_check
      _
    $region7: #{tpu_custom_call.1} parent=1 // pred_check_branch
      %28 = sbr.rel (0) target = $region9
    $region8: #{tpu_custom_call.1} parent=1 // pred_region
      %30 = vsyncadd [#allocation6], 0
      %s31 = sshll.u32 %s1, 4
      %s32 = int_to_ptr.hbm [resolvable:$true] %s31
      %s33 = sshll.u32 [#allocation5], 4
      %s34 = int_to_ptr.vmem [resolvable:$true] %s33
      %39 = dma.hbm_to_vmem [thread:$0]  %s32, 8192, %s34, [#allocation6], 64, 64, 4
    $region9: #{tpu_custom_call.1} parent=1 // pred_fallthru
      _
    // Predicated region
    $region10: #{tpu_custom_call.1} parent=1 // pred_check
      _
    $region11: #{tpu_custom_call.1} parent=1 // pred_check_branch
      %41 = sbr.rel (0) target = $region13
    $region12: #{tpu_custom_call.1} parent=1 // pred_region
      _
    $region13: #{tpu_custom_call.1} parent=1 // pred_fallthru
      _
    // Predicated region
    $region14: #{tpu_custom_call.1} parent=1 // pred_check
      _
    $region15: #{tpu_custom_call.1} parent=1 // pred_check_branch
      %43 = sbr.rel (0) target = $region17
    $region16: #{tpu_custom_call.1} parent=1 // pred_region
      %45 = vsyncadd [#allocation6], 0
      %s46 = sshll.u32 %s3, 4
      %s47 = int_to_ptr.hbm [resolvable:$true] %s46
      %s48 = sshll.u32 [#allocation7], 4
      %s49 = int_to_ptr.vmem [resolvable:$true] %s48
      %54 = dma.hbm_to_vmem [thread:$0]  %s47, 1024, %s49, [#allocation6], 64, 64, 4
    $region17: #{tpu_custom_call.1} parent=1 // pred_fallthru
      _
    // Predicated region
    $region18: #{tpu_custom_call.1} parent=1 // pred_check
      _
    $region19: #{tpu_custom_call.1} parent=1 // pred_check_branch
      %56 = sbr.rel (0) target = $region21
    $region20: #{tpu_custom_call.1} parent=1 // pred_region
      _
    $region21: #{tpu_custom_call.1} parent=1 // pred_fallthru
      _
    // Predicated region
    $region22: #{tpu_custom_call.1} parent=1 // pred_check
      _
    $region23: #{tpu_custom_call.1} parent=1 // pred_check_branch
      %58 = sbr.rel (0) target = $region25
    $region24: #{tpu_custom_call.1} parent=1 // pred_region
      %60 = dma.done [#allocation3], 512
    $region25: #{tpu_custom_call.1} parent=1 // pred_fallthru
      _
    // Predicated region
    $region26: #{tpu_custom_call.1} parent=1 // pred_check
      _
    $region27: #{tpu_custom_call.1} parent=1 // pred_check_branch
      %62 = sbr.rel (0) target = $region29
    $region28: #{tpu_custom_call.1} parent=1 // pred_region
      %64 = dma.done [#allocation6], 8192
    $region29: #{tpu_custom_call.1} parent=1 // pred_fallthru
      _
    // Predicated region
    $region30: #{tpu_custom_call.1} parent=1 // pred_check
      _
    $region31: #{tpu_custom_call.1} parent=1 // pred_check_branch
      %66 = sbr.rel (0) target = $region33
    $region32: #{tpu_custom_call.1} parent=1 // pred_region
      %68 = dma.done [#allocation6], 1024
    $region33: #{tpu_custom_call.1} parent=1 // pred_fallthru
      _
    %v69 = vld [vmem:[#allocation2] sm:$0xff]
    %v70 = vld [vmem:[#allocation2 + $0x8] sm:$0xff]
    %v71 = vld [vmem:[#allocation2 + $0x10] sm:$0xff]
    %v72 = vld [vmem:[#allocation2 + $0x18] sm:$0xff]
    %v73 = vld [vmem:[#allocation5] sm:$0xf]
    %v74 = vld [vmem:[#allocation5 + $0x4] sm:$0xf]
    %v75 = vld [vmem:[#allocation5 + $0x8] sm:$0xf]
    %v76 = vld [vmem:[#allocation5 + $0xc] sm:$0xf]
    %v77 = vld [vmem:[#allocation5 + $0x10] sm:$0xf]
    %v78 = vld [vmem:[#allocation5 + $0x14] sm:$0xf]
    %v79 = vld [vmem:[#allocation5 + $0x18] sm:$0xf]
    %v80 = vld [vmem:[#allocation5 + $0x1c] sm:$0xf]
    %v81 = vld [vmem:[#allocation5 + $0x20] sm:$0xf]
    %v82 = vld [vmem:[#allocation5 + $0x24] sm:$0xf]
    %v83 = vld [vmem:[#allocation5 + $0x28] sm:$0xf]
    %v84 = vld [vmem:[#allocation5 + $0x2c] sm:$0xf]
    %v85 = vld [vmem:[#allocation5 + $0x30] sm:$0xf]
    %v86 = vld [vmem:[#allocation5 + $0x34] sm:$0xf]
    %v87 = vld [vmem:[#allocation5 + $0x38] sm:$0xf]
    %v88 = vld [vmem:[#allocation5 + $0x3c] sm:$0xf]
    %v89 = vld [vmem:[#allocation5 + $0x40] sm:$0xf]
    %v90 = vld [vmem:[#allocation5 + $0x44] sm:$0xf]
    %v91 = vld [vmem:[#allocation5 + $0x48] sm:$0xf]
    %v92 = vld [vmem:[#allocation5 + $0x4c] sm:$0xf]
    %v93 = vld [vmem:[#allocation5 + $0x50] sm:$0xf]
    %v94 = vld [vmem:[#allocation5 + $0x54] sm:$0xf]
    %v95 = vld [vmem:[#allocation5 + $0x58] sm:$0xf]
    %v96 = vld [vmem:[#allocation5 + $0x5c] sm:$0xf]
    %v97 = vld [vmem:[#allocation5 + $0x60] sm:$0xf]
    %v98 = vld [vmem:[#allocation5 + $0x64] sm:$0xf]
    %v99 = vld [vmem:[#allocation5 + $0x68] sm:$0xf]
    %v100 = vld [vmem:[#allocation5 + $0x6c] sm:$0xf]
    %v101 = vld [vmem:[#allocation5 + $0x70] sm:$0xf]
    %v102 = vld [vmem:[#allocation5 + $0x74] sm:$0xf]
    %v103 = vld [vmem:[#allocation5 + $0x78] sm:$0xf]
    %v104 = vld [vmem:[#allocation5 + $0x7c] sm:$0xf]
    %v105 = vld [vmem:[#allocation5 + $0x80] sm:$0xf]
    %v106 = vld [vmem:[#allocation5 + $0x84] sm:$0xf]
    %v107 = vld [vmem:[#allocation5 + $0x88] sm:$0xf]
    %v108 = vld [vmem:[#allocation5 + $0x8c] sm:$0xf]
    %v109 = vld [vmem:[#allocation5 + $0x90] sm:$0xf]
    %v110 = vld [vmem:[#allocation5 + $0x94] sm:$0xf]
    %v111 = vld [vmem:[#allocation5 + $0x98] sm:$0xf]
    %v112 = vld [vmem:[#allocation5 + $0x9c] sm:$0xf]
    %v113 = vld [vmem:[#allocation5 + $0xa0] sm:$0xf]
    %v114 = vld [vmem:[#allocation5 + $0xa4] sm:$0xf]
    %v115 = vld [vmem:[#allocation5 + $0xa8] sm:$0xf]
    %v116 = vld [vmem:[#allocation5 + $0xac] sm:$0xf]
    %v117 = vld [vmem:[#allocation5 + $0xb0] sm:$0xf]
    %v118 = vld [vmem:[#allocation5 + $0xb4] sm:$0xf]
    %v119 = vld [vmem:[#allocation5 + $0xb8] sm:$0xf]
    %v120 = vld [vmem:[#allocation5 + $0xbc] sm:$0xf]
    %v121 = vld [vmem:[#allocation5 + $0xc0] sm:$0xf]
    %v122 = vld [vmem:[#allocation5 + $0xc4] sm:$0xf]
    %v123 = vld [vmem:[#allocation5 + $0xc8] sm:$0xf]
    %v124 = vld [vmem:[#allocation5 + $0xcc] sm:$0xf]
    %v125 = vld [vmem:[#allocation5 + $0xd0] sm:$0xf]
    %v126 = vld [vmem:[#allocation5 + $0xd4] sm:$0xf]
    %v127 = vld [vmem:[#allocation5 + $0xd8] sm:$0xf]
    %v128 = vld [vmem:[#allocation5 + $0xdc] sm:$0xf]
    %v129 = vld [vmem:[#allocation5 + $0xe0] sm:$0xf]
    %v130 = vld [vmem:[#allocation5 + $0xe4] sm:$0xf]
    %v131 = vld [vmem:[#allocation5 + $0xe8] sm:$0xf]
    %v132 = vld [vmem:[#allocation5 + $0xec] sm:$0xf]
    %v133 = vld [vmem:[#allocation5 + $0xf0] sm:$0xf]
    %v134 = vld [vmem:[#allocation5 + $0xf4] sm:$0xf]
    %v135 = vld [vmem:[#allocation5 + $0xf8] sm:$0xf]
    %v136 = vld [vmem:[#allocation5 + $0xfc] sm:$0xf]
    %v137 = vld [vmem:[#allocation5 + $0x100] sm:$0xf]
    %v138 = vld [vmem:[#allocation5 + $0x104] sm:$0xf]
    %v139 = vld [vmem:[#allocation5 + $0x108] sm:$0xf]
    %v140 = vld [vmem:[#allocation5 + $0x10c] sm:$0xf]
    %v141 = vld [vmem:[#allocation5 + $0x110] sm:$0xf]
    %v142 = vld [vmem:[#allocation5 + $0x114] sm:$0xf]
    %v143 = vld [vmem:[#allocation5 + $0x118] sm:$0xf]
    %v144 = vld [vmem:[#allocation5 + $0x11c] sm:$0xf]
    %v145 = vld [vmem:[#allocation5 + $0x120] sm:$0xf]
    %v146 = vld [vmem:[#allocation5 + $0x124] sm:$0xf]
    %v147 = vld [vmem:[#allocation5 + $0x128] sm:$0xf]
    %v148 = vld [vmem:[#allocation5 + $0x12c] sm:$0xf]
    %v149 = vld [vmem:[#allocation5 + $0x130] sm:$0xf]
    %v150 = vld [vmem:[#allocation5 + $0x134] sm:$0xf]
    %v151 = vld [vmem:[#allocation5 + $0x138] sm:$0xf]
    %v152 = vld [vmem:[#allocation5 + $0x13c] sm:$0xf]
    %v153 = vld [vmem:[#allocation5 + $0x140] sm:$0xf]
    %v154 = vld [vmem:[#allocation5 + $0x144] sm:$0xf]
    %v155 = vld [vmem:[#allocation5 + $0x148] sm:$0xf]
    %v156 = vld [vmem:[#allocation5 + $0x14c] sm:$0xf]
    %v157 = vld [vmem:[#allocation5 + $0x150] sm:$0xf]
    %v158 = vld [vmem:[#allocation5 + $0x154] sm:$0xf]
    %v159 = vld [vmem:[#allocation5 + $0x158] sm:$0xf]
    %v160 = vld [vmem:[#allocation5 + $0x15c] sm:$0xf]
    %v161 = vld [vmem:[#allocation5 + $0x160] sm:$0xf]
    %v162 = vld [vmem:[#allocation5 + $0x164] sm:$0xf]
    %v163 = vld [vmem:[#allocation5 + $0x168] sm:$0xf]
    %v164 = vld [vmem:[#allocation5 + $0x16c] sm:$0xf]
    %v165 = vld [vmem:[#allocation5 + $0x170] sm:$0xf]
    %v166 = vld [vmem:[#allocation5 + $0x174] sm:$0xf]
    %v167 = vld [vmem:[#allocation5 + $0x178] sm:$0xf]
    %v168 = vld [vmem:[#allocation5 + $0x17c] sm:$0xf]
    %v169 = vld [vmem:[#allocation5 + $0x180] sm:$0xf]
    %v170 = vld [vmem:[#allocation5 + $0x184] sm:$0xf]
    %v171 = vld [vmem:[#allocation5 + $0x188] sm:$0xf]
    %v172 = vld [vmem:[#allocation5 + $0x18c] sm:$0xf]
    %v173 = vld [vmem:[#allocation5 + $0x190] sm:$0xf]
    %v174 = vld [vmem:[#allocation5 + $0x194] sm:$0xf]
    %v175 = vld [vmem:[#allocation5 + $0x198] sm:$0xf]
    %v176 = vld [vmem:[#allocation5 + $0x19c] sm:$0xf]
    %v177 = vld [vmem:[#allocation5 + $0x1a0] sm:$0xf]
    %v178 = vld [vmem:[#allocation5 + $0x1a4] sm:$0xf]
    %v179 = vld [vmem:[#allocation5 + $0x1a8] sm:$0xf]
    %v180 = vld [vmem:[#allocation5 + $0x1ac] sm:$0xf]
    %v181 = vld [vmem:[#allocation5 + $0x1b0] sm:$0xf]
    %v182 = vld [vmem:[#allocation5 + $0x1b4] sm:$0xf]
    %v183 = vld [vmem:[#allocation5 + $0x1b8] sm:$0xf]
    %v184 = vld [vmem:[#allocation5 + $0x1bc] sm:$0xf]
    %v185 = vld [vmem:[#allocation5 + $0x1c0] sm:$0xf]
    %v186 = vld [vmem:[#allocation5 + $0x1c4] sm:$0xf]
    %v187 = vld [vmem:[#allocation5 + $0x1c8] sm:$0xf]
    %v188 = vld [vmem:[#allocation5 + $0x1cc] sm:$0xf]
    %v189 = vld [vmem:[#allocation5 + $0x1d0] sm:$0xf]
    %v190 = vld [vmem:[#allocation5 + $0x1d4] sm:$0xf]
    %v191 = vld [vmem:[#allocation5 + $0x1d8] sm:$0xf]
    %v192 = vld [vmem:[#allocation5 + $0x1dc] sm:$0xf]
    %v193 = vld [vmem:[#allocation5 + $0x1e0] sm:$0xf]
    %v194 = vld [vmem:[#allocation5 + $0x1e4] sm:$0xf]
    %v195 = vld [vmem:[#allocation5 + $0x1e8] sm:$0xf]
    %v196 = vld [vmem:[#allocation5 + $0x1ec] sm:$0xf]
    %v197 = vld [vmem:[#allocation5 + $0x1f0] sm:$0xf]
    %v198 = vld [vmem:[#allocation5 + $0x1f4] sm:$0xf]
    %v199 = vld [vmem:[#allocation5 + $0x1f8] sm:$0xf]
    %v200 = vld [vmem:[#allocation5 + $0x1fc] sm:$0xf]
    %v201 = vld [vmem:[%s2] sm:$0x1]
    %v203 = vperm.slane %v201, 0
    %v209 = vunpack.c.l.b16 %v69
    %v210 = vunpack.c.h.b16 %v69
    %v211 = vunpack.c.l.b16 %v70
    %v212 = vunpack.c.h.b16 %v70
    %v213 = vunpack.c.l.b16 %v71
    %v214 = vunpack.c.h.b16 %v71
    %v215 = vunpack.c.l.b16 %v72
    %v216 = vunpack.c.h.b16 %v72
    %v217 = vpack.c.b16 %v209, %v209
    %v218 = vpack.c.b16 %v210, %v210
    %v219 = vpack.c.b16 %v211, %v211
    %v220 = vpack.c.b16 %v212, %v212
    %v221 = vpack.c.b16 %v213, %v213
    %v222 = vpack.c.b16 %v214, %v214
    %v223 = vpack.c.b16 %v215, %v215
    %v224 = vpack.c.b16 %v216, %v216
    %v361 = vunpack.c.l.b16 %v73
    %v362 = vunpack.c.l.b16 %v74
    %v363 = vunpack.c.l.b16 %v75
    %v364 = vunpack.c.l.b16 %v76
    %v365 = vunpack.c.l.b16 %v77
    %v366 = vunpack.c.l.b16 %v78
    %v367 = vunpack.c.l.b16 %v79
    %v368 = vunpack.c.l.b16 %v80
    %v369 = vunpack.c.l.b16 %v81
    %v370 = vunpack.c.l.b16 %v82
    %v371 = vunpack.c.l.b16 %v83
    %v372 = vunpack.c.l.b16 %v84
    %v373 = vunpack.c.l.b16 %v85
    %v374 = vunpack.c.l.b16 %v86
    %v375 = vunpack.c.l.b16 %v87
    %v376 = vunpack.c.l.b16 %v88
    %v377 = vunpack.c.l.b16 %v89
    %v378 = vunpack.c.l.b16 %v90
    %v379 = vunpack.c.l.b16 %v91
    %v380 = vunpack.c.l.b16 %v92
    %v381 = vunpack.c.l.b16 %v93
    %v382 = vunpack.c.l.b16 %v94
    %v383 = vunpack.c.l.b16 %v95
    %v384 = vunpack.c.l.b16 %v96
    %v385 = vunpack.c.l.b16 %v97
    %v386 = vunpack.c.l.b16 %v98
    %v387 = vunpack.c.l.b16 %v99
    %v388 = vunpack.c.l.b16 %v100
    %v389 = vunpack.c.l.b16 %v101
    %v390 = vunpack.c.l.b16 %v102
    %v391 = vunpack.c.l.b16 %v103
    %v392 = vunpack.c.l.b16 %v104
    %v393 = vunpack.c.l.b16 %v105
    %v394 = vunpack.c.l.b16 %v106
    %v395 = vunpack.c.l.b16 %v107
    %v396 = vunpack.c.l.b16 %v108
    %v397 = vunpack.c.l.b16 %v109
    %v398 = vunpack.c.l.b16 %v110
    %v399 = vunpack.c.l.b16 %v111
    %v400 = vunpack.c.l.b16 %v112
    %v401 = vunpack.c.l.b16 %v113
    %v402 = vunpack.c.l.b16 %v114
    %v403 = vunpack.c.l.b16 %v115
    %v404 = vunpack.c.l.b16 %v116
    %v405 = vunpack.c.l.b16 %v117
    %v406 = vunpack.c.l.b16 %v118
    %v407 = vunpack.c.l.b16 %v119
    %v408 = vunpack.c.l.b16 %v120
    %v409 = vunpack.c.l.b16 %v121
    %v410 = vunpack.c.l.b16 %v122
    %v411 = vunpack.c.l.b16 %v123
    %v412 = vunpack.c.l.b16 %v124
    %v413 = vunpack.c.l.b16 %v125
    %v414 = vunpack.c.l.b16 %v126
    %v415 = vunpack.c.l.b16 %v127
    %v416 = vunpack.c.l.b16 %v128
    %v417 = vunpack.c.l.b16 %v129
    %v418 = vunpack.c.l.b16 %v130
    %v419 = vunpack.c.l.b16 %v131
    %v420 = vunpack.c.l.b16 %v132
    %v421 = vunpack.c.l.b16 %v133
    %v422 = vunpack.c.l.b16 %v134
    %v423 = vunpack.c.l.b16 %v135
    %v424 = vunpack.c.l.b16 %v136
    %v425 = vunpack.c.l.b16 %v137
    %v426 = vunpack.c.l.b16 %v138
    %v427 = vunpack.c.l.b16 %v139
    %v428 = vunpack.c.l.b16 %v140
    %v429 = vunpack.c.l.b16 %v141
    %v430 = vunpack.c.l.b16 %v142
    %v431 = vunpack.c.l.b16 %v143
    %v432 = vunpack.c.l.b16 %v144
    %v433 = vunpack.c.l.b16 %v145
    %v434 = vunpack.c.l.b16 %v146
    %v435 = vunpack.c.l.b16 %v147
    %v436 = vunpack.c.l.b16 %v148
    %v437 = vunpack.c.l.b16 %v149
    %v438 = vunpack.c.l.b16 %v150
    %v439 = vunpack.c.l.b16 %v151
    %v440 = vunpack.c.l.b16 %v152
    %v441 = vunpack.c.l.b16 %v153
    %v442 = vunpack.c.l.b16 %v154
    %v443 = vunpack.c.l.b16 %v155
    %v444 = vunpack.c.l.b16 %v156
    %v445 = vunpack.c.l.b16 %v157
    %v446 = vunpack.c.l.b16 %v158
    %v447 = vunpack.c.l.b16 %v159
    %v448 = vunpack.c.l.b16 %v160
    %v449 = vunpack.c.l.b16 %v161
    %v450 = vunpack.c.l.b16 %v162
    %v451 = vunpack.c.l.b16 %v163
    %v452 = vunpack.c.l.b16 %v164
    %v453 = vunpack.c.l.b16 %v165
    %v454 = vunpack.c.l.b16 %v166
    %v455 = vunpack.c.l.b16 %v167
    %v456 = vunpack.c.l.b16 %v168
    %v457 = vunpack.c.l.b16 %v169
    %v458 = vunpack.c.l.b16 %v170
    %v459 = vunpack.c.l.b16 %v171
    %v460 = vunpack.c.l.b16 %v172
    %v461 = vunpack.c.l.b16 %v173
    %v462 = vunpack.c.l.b16 %v174
    %v463 = vunpack.c.l.b16 %v175
    %v464 = vunpack.c.l.b16 %v176
    %v465 = vunpack.c.l.b16 %v177
    %v466 = vunpack.c.l.b16 %v178
    %v467 = vunpack.c.l.b16 %v179
    %v468 = vunpack.c.l.b16 %v180
    %v469 = vunpack.c.l.b16 %v181
    %v470 = vunpack.c.l.b16 %v182
    %v471 = vunpack.c.l.b16 %v183
    %v472 = vunpack.c.l.b16 %v184
    %v473 = vunpack.c.l.b16 %v185
    %v474 = vunpack.c.l.b16 %v186
    %v475 = vunpack.c.l.b16 %v187
    %v476 = vunpack.c.l.b16 %v188
    %v477 = vunpack.c.l.b16 %v189
    %v478 = vunpack.c.l.b16 %v190
    %v479 = vunpack.c.l.b16 %v191
    %v480 = vunpack.c.l.b16 %v192
    %v481 = vunpack.c.l.b16 %v193
    %v482 = vunpack.c.l.b16 %v194
    %v483 = vunpack.c.l.b16 %v195
    %v484 = vunpack.c.l.b16 %v196
    %v485 = vunpack.c.l.b16 %v197
    %v486 = vunpack.c.l.b16 %v198
    %v487 = vunpack.c.l.b16 %v199
    %v488 = vunpack.c.l.b16 %v200
    %v489 = vpack.c.b16 %v362, %v361
    %v490 = vpack.c.b16 %v364, %v363
    %v491 = vpack.c.b16 %v366, %v365
    %v492 = vpack.c.b16 %v368, %v367
    %v493 = vpack.c.b16 %v370, %v369
    %v494 = vpack.c.b16 %v372, %v371
    %v495 = vpack.c.b16 %v374, %v373
    %v496 = vpack.c.b16 %v376, %v375
    %v497 = vpack.c.b16 %v378, %v377
    %v498 = vpack.c.b16 %v380, %v379
    %v499 = vpack.c.b16 %v382, %v381
    %v500 = vpack.c.b16 %v384, %v383
    %v501 = vpack.c.b16 %v386, %v385
    %v502 = vpack.c.b16 %v388, %v387
    %v503 = vpack.c.b16 %v390, %v389
    %v504 = vpack.c.b16 %v392, %v391
    %v505 = vpack.c.b16 %v394, %v393
    %v506 = vpack.c.b16 %v396, %v395
    %v507 = vpack.c.b16 %v398, %v397
    %v508 = vpack.c.b16 %v400, %v399
    %v509 = vpack.c.b16 %v402, %v401
    %v510 = vpack.c.b16 %v404, %v403
    %v511 = vpack.c.b16 %v406, %v405
    %v512 = vpack.c.b16 %v408, %v407
    %v513 = vpack.c.b16 %v410, %v409
    %v514 = vpack.c.b16 %v412, %v411
    %v515 = vpack.c.b16 %v414, %v413
    %v516 = vpack.c.b16 %v416, %v415
    %v517 = vpack.c.b16 %v418, %v417
    %v518 = vpack.c.b16 %v420, %v419
    %v519 = vpack.c.b16 %v422, %v421
    %v520 = vpack.c.b16 %v424, %v423
    %v521 = vpack.c.b16 %v426, %v425
    %v522 = vpack.c.b16 %v428, %v427
    %v523 = vpack.c.b16 %v430, %v429
    %v524 = vpack.c.b16 %v432, %v431
    %v525 = vpack.c.b16 %v434, %v433
    %v526 = vpack.c.b16 %v436, %v435
    %v527 = vpack.c.b16 %v438, %v437
    %v528 = vpack.c.b16 %v440, %v439
    %v529 = vpack.c.b16 %v442, %v441
    %v530 = vpack.c.b16 %v444, %v443
    %v531 = vpack.c.b16 %v446, %v445
    %v532 = vpack.c.b16 %v448, %v447
    %v533 = vpack.c.b16 %v450, %v449
    %v534 = vpack.c.b16 %v452, %v451
    %v535 = vpack.c.b16 %v454, %v453
    %v536 = vpack.c.b16 %v456, %v455
    %v537 = vpack.c.b16 %v458, %v457
    %v538 = vpack.c.b16 %v460, %v459
    %v539 = vpack.c.b16 %v462, %v461
    %v540 = vpack.c.b16 %v464, %v463
    %v541 = vpack.c.b16 %v466, %v465
    %v542 = vpack.c.b16 %v468, %v467
    %v543 = vpack.c.b16 %v470, %v469
    %v544 = vpack.c.b16 %v472, %v471
    %v545 = vpack.c.b16 %v474, %v473
    %v546 = vpack.c.b16 %v476, %v475
    %v547 = vpack.c.b16 %v478, %v477
    %v548 = vpack.c.b16 %v480, %v479
    %v549 = vpack.c.b16 %v482, %v481
    %v550 = vpack.c.b16 %v484, %v483
    %v551 = vpack.c.b16 %v486, %v485
    %v552 = vpack.c.b16 %v488, %v487
    %617 = vmatpush.bf16.msra.mxu0 %v496
    %618 = vmatpush.bf16.msra.mxu0 %v495
    %619 = vmatpush.bf16.msra.mxu0 %v494
    %620 = vmatpush.bf16.msra.mxu0 %v493
    %621 = vmatpush.bf16.msra.mxu0 %v492
    %622 = vmatpush.bf16.msra.mxu0 %v491
    %623 = vmatpush.bf16.msra.mxu0 %v490
    %624 = vmatpush.bf16.msra.mxu0 %v489
    %625 = vmatmul.bf16.gmra.mxu0 %v217
    %v626 = vpop.f32.mrf.mxu0
    %v627 = vadd.f32 %v203, %v626
    %v628 = vpop.f32.mrf.mxu0
    %629 = vdwg.mxu0
    %630 = vmatpush.bf16.msra.mxu0 %v504
    %631 = vmatpush.bf16.msra.mxu0 %v503
    %632 = vmatpush.bf16.msra.mxu0 %v502
    %633 = vmatpush.bf16.msra.mxu0 %v501
    %634 = vmatpush.bf16.msra.mxu0 %v500
    %635 = vmatpush.bf16.msra.mxu0 %v499
    %636 = vmatpush.bf16.msra.mxu0 %v498
    %637 = vmatpush.bf16.msra.mxu0 %v497
    %638 = vmatmul.bf16.gmra.mxu0 %v218
    %v639 = vpop.f32.mrf.mxu0
    %v640 = vadd.f32 %v627, %v639
    %v641 = vpop.f32.mrf.mxu0
    %642 = vdwg.mxu0
    %643 = vmatpush.bf16.msra.mxu0 %v512
    %644 = vmatpush.bf16.msra.mxu0 %v511
    %645 = vmatpush.bf16.msra.mxu0 %v510
    %646 = vmatpush.bf16.msra.mxu0 %v509
    %647 = vmatpush.bf16.msra.mxu0 %v508
    %648 = vmatpush.bf16.msra.mxu0 %v507
    %649 = vmatpush.bf16.msra.mxu0 %v506
    %650 = vmatpush.bf16.msra.mxu0 %v505
    %651 = vmatmul.bf16.gmra.mxu0 %v219
    %v652 = vpop.f32.mrf.mxu0
    %v653 = vadd.f32 %v640, %v652
    %v654 = vpop.f32.mrf.mxu0
    %655 = vdwg.mxu0
    %656 = vmatpush.bf16.msra.mxu0 %v520
    %657 = vmatpush.bf16.msra.mxu0 %v519
    %658 = vmatpush.bf16.msra.mxu0 %v518
    %659 = vmatpush.bf16.msra.mxu0 %v517
    %660 = vmatpush.bf16.msra.mxu0 %v516
    %661 = vmatpush.bf16.msra.mxu0 %v515
    %662 = vmatpush.bf16.msra.mxu0 %v514
    %663 = vmatpush.bf16.msra.mxu0 %v513
    %664 = vmatmul.bf16.gmra.mxu0 %v220
    %v665 = vpop.f32.mrf.mxu0
    %v666 = vadd.f32 %v653, %v665
    %v667 = vpop.f32.mrf.mxu0
    %668 = vdwg.mxu0
    %669 = vmatpush.bf16.msra.mxu0 %v528
    %670 = vmatpush.bf16.msra.mxu0 %v527
    %671 = vmatpush.bf16.msra.mxu0 %v526
    %672 = vmatpush.bf16.msra.mxu0 %v525
    %673 = vmatpush.bf16.msra.mxu0 %v524
    %674 = vmatpush.bf16.msra.mxu0 %v523
    %675 = vmatpush.bf16.msra.mxu0 %v522
    %676 = vmatpush.bf16.msra.mxu0 %v521
    %677 = vmatmul.bf16.gmra.mxu0 %v221
    %v678 = vpop.f32.mrf.mxu0
    %v679 = vadd.f32 %v666, %v678
    %v680 = vpop.f32.mrf.mxu0
    %681 = vdwg.mxu0
    %682 = vmatpush.bf16.msra.mxu0 %v536
    %683 = vmatpush.bf16.msra.mxu0 %v535
    %684 = vmatpush.bf16.msra.mxu0 %v534
    %685 = vmatpush.bf16.msra.mxu0 %v533
    %686 = vmatpush.bf16.msra.mxu0 %v532
    %687 = vmatpush.bf16.msra.mxu0 %v531
    %688 = vmatpush.bf16.msra.mxu0 %v530
    %689 = vmatpush.bf16.msra.mxu0 %v529
    %690 = vmatmul.bf16.gmra.mxu0 %v222
    %v691 = vpop.f32.mrf.mxu0
    %v692 = vadd.f32 %v679, %v691
    %v693 = vpop.f32.mrf.mxu0
    %694 = vdwg.mxu0
    %695 = vmatpush.bf16.msra.mxu0 %v544
    %696 = vmatpush.bf16.msra.mxu0 %v543
    %697 = vmatpush.bf16.msra.mxu0 %v542
    %698 = vmatpush.bf16.msra.mxu0 %v541
    %699 = vmatpush.bf16.msra.mxu0 %v540
    %700 = vmatpush.bf16.msra.mxu0 %v539
    %701 = vmatpush.bf16.msra.mxu0 %v538
    %702 = vmatpush.bf16.msra.mxu0 %v537
    %703 = vmatmul.bf16.gmra.mxu0 %v223
    %v704 = vpop.f32.mrf.mxu0
    %v705 = vadd.f32 %v692, %v704
    %v706 = vpop.f32.mrf.mxu0
    %707 = vdwg.mxu0
    %708 = vmatpush.bf16.msra.mxu0 %v552
    %709 = vmatpush.bf16.msra.mxu0 %v551
    %710 = vmatpush.bf16.msra.mxu0 %v550
    %711 = vmatpush.bf16.msra.mxu0 %v549
    %712 = vmatpush.bf16.msra.mxu0 %v548
    %713 = vmatpush.bf16.msra.mxu0 %v547
    %714 = vmatpush.bf16.msra.mxu0 %v546
    %715 = vmatpush.bf16.msra.mxu0 %v545
    %716 = vmatmul.bf16.gmra.mxu0 %v224
    %v717 = vpop.f32.mrf.mxu0
    %v718 = vadd.f32 %v705, %v717
    %v719 = vpop.f32.mrf.mxu0
    %720 = vdwg.mxu0
    %v721 = vmax.f32 %v718, 0.0
    %722 = vst [vmem:[#allocation8] sm:$0xff] %v721
    %v723 = vpack.c.bf16 %v721, %v721
    %v724 = vld [vmem:[#allocation7] sm:$0xf]
    %v725 = vld [vmem:[#allocation7 + $0x4] sm:$0xf]
    %v726 = vld [vmem:[#allocation7 + $0x8] sm:$0xf]
    %v727 = vld [vmem:[#allocation7 + $0xc] sm:$0xf]
    %v728 = vld [vmem:[#allocation7 + $0x10] sm:$0xf]
    %v729 = vld [vmem:[#allocation7 + $0x14] sm:$0xf]
    %v730 = vld [vmem:[#allocation7 + $0x18] sm:$0xf]
    %v731 = vld [vmem:[#allocation7 + $0x1c] sm:$0xf]
    %v732 = vld [vmem:[#allocation7 + $0x20] sm:$0xf]
    %v733 = vld [vmem:[#allocation7 + $0x24] sm:$0xf]
    %v734 = vld [vmem:[#allocation7 + $0x28] sm:$0xf]
    %v735 = vld [vmem:[#allocation7 + $0x2c] sm:$0xf]
    %v736 = vld [vmem:[#allocation7 + $0x30] sm:$0xf]
    %v737 = vld [vmem:[#allocation7 + $0x34] sm:$0xf]
    %v738 = vld [vmem:[#allocation7 + $0x38] sm:$0xf]
    %v739 = vld [vmem:[#allocation7 + $0x3c] sm:$0xf]
    %v740 = vld [vmem:[%s4] sm:$0x1]
    %v742 = vperm.slane %v740, 0
    %v760 = vunpack.c.l.b16 %v724
    %v761 = vunpack.c.l.b16 %v725
    %v762 = vunpack.c.l.b16 %v726
    %v763 = vunpack.c.l.b16 %v727
    %v764 = vunpack.c.l.b16 %v728
    %v765 = vunpack.c.l.b16 %v729
    %v766 = vunpack.c.l.b16 %v730
    %v767 = vunpack.c.l.b16 %v731
    %v768 = vunpack.c.l.b16 %v732
    %v769 = vunpack.c.l.b16 %v733
    %v770 = vunpack.c.l.b16 %v734
    %v771 = vunpack.c.l.b16 %v735
    %v772 = vunpack.c.l.b16 %v736
    %v773 = vunpack.c.l.b16 %v737
    %v774 = vunpack.c.l.b16 %v738
    %v775 = vunpack.c.l.b16 %v739
    %v776 = vpack.c.b16 %v761, %v760
    %v777 = vpack.c.b16 %v763, %v762
    %v778 = vpack.c.b16 %v765, %v764
    %v779 = vpack.c.b16 %v767, %v766
    %v780 = vpack.c.b16 %v769, %v768
    %v781 = vpack.c.b16 %v771, %v770
    %v782 = vpack.c.b16 %v773, %v772
    %v783 = vpack.c.b16 %v775, %v774
    %792 = vmatpush.bf16.msra.mxu0 %v783
    %793 = vmatpush.bf16.msra.mxu0 %v782
    %794 = vmatpush.bf16.msra.mxu0 %v781
    %795 = vmatpush.bf16.msra.mxu0 %v780
    %796 = vmatpush.bf16.msra.mxu0 %v779
    %797 = vmatpush.bf16.msra.mxu0 %v778
    %798 = vmatpush.bf16.msra.mxu0 %v777
    %799 = vmatpush.bf16.msra.mxu0 %v776
    %800 = vmatmul.bf16.gmra.mxu0 %v723
    %v801 = vpop.f32.mrf.mxu0
    %v802 = vadd.f32 %v742, %v801
    %v803 = vpop.f32.mrf.mxu0
    %804 = vdwg.mxu0
    %805 = vst [vmem:[#allocation9] sm:$0xff] %v802
    // Predicated region
    $region34: #{tpu_custom_call.1} parent=1 // pred_check
      _
    $region35: #{tpu_custom_call.1} parent=1 // pred_check_branch
      %807 = sbr.rel (0) target = $region37
    $region36: #{tpu_custom_call.1} parent=1 // pred_region
      %809 = vsyncadd [#allocation4], 0
      %s811 = sshll.u32 [#allocation8], 4
      %s812 = int_to_ptr.vmem [resolvable:$true] %s811
      %s813 = sshll.u32 %s5, 4
      %s814 = int_to_ptr.hbm [resolvable:$true] %s813
      %816 = dma.vmem_to_hbm [thread:$0]  %s812, 128, %s814, [#allocation4]
    $region37: #{tpu_custom_call.1} parent=1 // pred_fallthru
      _
    // Predicated region
    $region38: #{tpu_custom_call.1} parent=1 // pred_check
      _
    $region39: #{tpu_custom_call.1} parent=1 // pred_check_branch
      %818 = sbr.rel (0) target = $region41
    $region40: #{tpu_custom_call.1} parent=1 // pred_region
      %820 = vsyncadd [#allocation10], 0
      %s822 = sshll.u32 [#allocation9], 4
      %s823 = int_to_ptr.vmem [resolvable:$true] %s822
      %s824 = sshll.u32 %s6, 4
      %s825 = int_to_ptr.hbm [resolvable:$true] %s824
      %827 = dma.vmem_to_hbm [thread:$0]  %s823, 128, %s825, [#allocation10]
    $region41: #{tpu_custom_call.1} parent=1 // pred_fallthru
      _
    // Predicated region
    $region42: #{tpu_custom_call.1} parent=1 // pred_check
      _
    $region43: #{tpu_custom_call.1} parent=1 // pred_check_branch
      %829 = sbr.rel (0) target = $region45
    $region44: #{tpu_custom_call.1} parent=1 // pred_region
      %831 = dma.done [#allocation4], 128
    $region45: #{tpu_custom_call.1} parent=1 // pred_fallthru
      _
    // Predicated region
    $region46: #{tpu_custom_call.1} parent=1 // pred_check
      _
    $region47: #{tpu_custom_call.1} parent=1 // pred_check_branch
      %833 = sbr.rel (0) target = $region49
    $region48: #{tpu_custom_call.1} parent=1 // pred_region
      %835 = dma.done [#allocation10], 128
    $region49: #{tpu_custom_call.1} parent=1 // pred_fallthru
      _
    %836 = vsyncpa [#allocation3], 1
    %837 = vsyncpa [#allocation6], 1
    %838 = vsyncpa [#allocation4], 1
    %839 = vsyncpa [#allocation10], 1

</llo_original>
